<compile_context>
chip_gen: v6e
topology: v6e:2x2x1
jax: 0.10.0
libtpu: 0.0.40
codegen_flags: <defaults>
</compile_context>

<pallas_src>
import functools

import jax
import jax.numpy as jnp
from jax import lax
from jax.experimental import pallas as pl
from jax.experimental.pallas import tpu as pltpu

H0 = 64
W0 = 64
L = H0 * W0  # 4096 flattened spatial positions (constant through the whole conv stack)


# ----------------------------------------------------------------------------
# Lane-shift helper (pltpu.roll) + one-time convention guard.
# ----------------------------------------------------------------------------
@functools.cache
def _roll_matches_jnp() -> bool:
    """pltpu.roll is expected to match jnp.roll (positive shift moves data to higher lanes).
    Verified once with a tiny probe so the conv tap direction can never silently flip."""
    def k(x_ref, o_ref):
        o_ref[...] = pltpu.roll(x_ref[...], 1, axis=1)

    x = jnp.broadcast_to(jnp.arange(128, dtype=jnp.float32), (8, 128))
    y = pl.pallas_call(k, out_shape=jax.ShapeDtypeStruct((8, 128), jnp.float32))(x)
    return bool(y[0, 0] == 127.0)


def _shift_lanes(x, delta):
    """out[:, p] = x[:, (p + delta) % L] — one XLU lane rotation per vreg.
    Circular; wrapped lanes are always zeroed by the callers' boundary masks."""
    n = x.shape[-1]
    amt = ((-delta) if _roll_matches_jnp() else delta) % n
    if amt == 0:
        return x
    return pltpu.roll(x, amt, axis=1)


# ----------------------------------------------------------------------------
# In-kernel helpers (operate on values living in VMEM / vregs).
# ----------------------------------------------------------------------------
def _conv3x3_relu(x, w9, b, stride, hh, ww):
    """Fused 3x3 conv (padding=1) + bias + ReLU on the sparse 64x64 flat grid (spacing `stride`).

    x:   (Cin, L)      bf16 activations (valid where hh, ww are multiples of `stride`)
    w9:  (Cout, 9*Cin) bf16, column block t = kh*3 + kw holds w[:, :, kh, kw]
    b:   (Cout, 1)     f32
    hh, ww: (1, L) int32 original-grid row / col index of every lane
    Returns (Cout, L) bf16.
    """
    # Boundary masks hoisted: built once per layer, not per tap.
    m_up = hh >= stride
    m_down = hh < H0 - stride
    m_left = ww >= stride
    m_right = ww < W0 - stride

    taps = []
    for t in range(9):
        dh, dw = t // 3 - 1, t % 3 - 1
        xs = x if (dh == 0 and dw == 0) else _shift_lanes(x, stride * (dh * W0 + dw))
        mask = None
        for m, use in ((m_up, dh < 0), (m_down, dh > 0), (m_left, dw < 0), (m_right, dw > 0)):
            if use:
                mask = m if mask is None else jnp.logical_and(mask, m)
        if mask is not None:
            xs = jnp.where(mask, xs, 0.0)          # zero-padding semantics of padding=1
        taps.append(xs)

    x9 = jnp.concatenate(taps, axis=0)                           # (9*Cin, L) bf16, tap-major
    acc = jnp.dot(w9, x9, preferred_element_type=jnp.float32)    # ONE deep-K MXU matmul, f32 acc
    return jnp.maximum(acc + b, 0.0).astype(jnp.bfloat16)        # fused bias + ReLU -> bf16


def _maxpool2x2(y, stride):
    """2x2/2 max pool on the spacing-`stride` grid; results valid at spacing 2*stride."""
    m = jnp.maximum(y, _shift_lanes(y, stride))          # pair max along w
    return jnp.maximum(m, _shift_lanes(m, stride * W0))  # pair max along h


# ----------------------------------------------------------------------------
# Kernel 1: conv1+pool -> conv2+pool -> conv3+pool -> compact to (64, 64) per image.
# ----------------------------------------------------------------------------
def _conv_stack_kernel(x_ref, w1_ref, b1_ref, w2_ref, b2_ref, w3_ref, b3_ref, sel_ref, o_ref):
    pos = lax.broadcasted_iota(jnp.int32, (1, L), 1)
    hh = pos // W0
    ww = pos % W0

    x = x_ref[0]                                                  # (3, 4096) bf16
    y = _conv3x3_relu(x, w1_ref[...], b1_ref[...], 1, hh, ww)     # (16, L), spacing 1
    y = _maxpool2x2(y, 1)                                         # spacing 2
    y = _conv3x3_relu(y, w2_ref[...], b2_ref[...], 2, hh, ww)     # (32, L), spacing 2
    y = _maxpool2x2(y, 2)                                         # spacing 4
    y = _conv3x3_relu(y, w3_ref[...], b3_ref[...], 4, hh, ww)     # (64, L), spacing 4
    y = _maxpool2x2(y, 4)                                         # spacing 8 -> 8x8 valid grid

    # Compact the 64 valid positions (flat p = 512*i + 8*j) with one small selection matmul so
    # the row-major flatten of the (64ch, 64pos) output equals torch's .view(-1, 64*8*8) order.
    # `sel` is a constant kernel input (resident across the grid), not rebuilt per image.
    o_ref[0] = jnp.dot(y, sel_ref[...], preferred_element_type=jnp.float32).astype(o_ref.dtype)


def _fold_taps(w):
    """(Cout, Cin, 3, 3) -> (Cout, 9*Cin) bf16; column t*Cin + ci = w[:, ci, kh, kw], t = kh*3+kw
    (matches the tap-major stacking of the in-kernel (9*Cin, L) input). Free trace-time reshape."""
    co, ci = w.shape[0], w.shape[1]
    return jnp.transpose(w, (0, 2, 3, 1)).reshape(co, 9 * ci).astype(jnp.bfloat16)


def _make_sel():
    """(4096, 64) 0/1 selection matrix: column q = i*8 + j selects flat position 512*i + 8*j."""
    q = jnp.arange(64, dtype=jnp.int32)
    valid_p = (8 * W0) * (q // 8) + 8 * (q % 8)
    return (jnp.arange(L, dtype=jnp.int32)[:, None] == valid_p[None, :]).astype(jnp.bfloat16)


def conv_stack(x_nchw, params):
    N = x_nchw.shape[0]
    x_flat = x_nchw.reshape(N, 3, L).astype(jnp.bfloat16)   # free reshape; bf16 halves input DMA

    w1 = _fold_taps(params["conv1_w"])
    w2 = _fold_taps(params["conv2_w"])
    w3 = _fold_taps(params["conv3_w"])
    b1 = params["conv1_b"].reshape(16, 1)
    b2 = params["conv2_b"].reshape(32, 1)
    b3 = params["conv3_b"].reshape(64, 1)
    sel = _make_sel()

    out = pl.pallas_call(
        _conv_stack_kernel,
        out_shape=jax.ShapeDtypeStruct((N, 64, 64), jnp.bfloat16),
        grid=(N,),
        in_specs=[
            pl.BlockSpec((1, 3, L), lambda n: (n, 0, 0)),
            pl.BlockSpec((16, 27), lambda n: (0, 0)),     # weights/sel: constant index maps ->
            pl.BlockSpec((16, 1), lambda n: (0, 0)),      # DMA'd once, resident across the grid
            pl.BlockSpec((32, 144), lambda n: (0, 0)),
            pl.BlockSpec((32, 1), lambda n: (0, 0)),
            pl.BlockSpec((64, 288), lambda n: (0, 0)),
            pl.BlockSpec((64, 1), lambda n: (0, 0)),
            pl.BlockSpec((L, 64), lambda n: (0, 0)),
        ],
        out_specs=pl.BlockSpec((1, 64, 64), lambda n: (n, 0, 0)),
        compiler_params=pltpu.CompilerParams(
            dimension_semantics=("parallel",),            # batch across TensorCores on v7x
            vmem_limit_bytes=32 * 1024 * 1024,            # ~5-6 MiB/step actually used
        ),
    )(x_flat, w1, b1, w2, b2, w3, b3, sel)
    return out.reshape(N, 64 * 8 * 8)   # bf16 features; order == torch .view on NCHW (exact)


# ----------------------------------------------------------------------------
# Kernel 2: fc1 + ReLU + (dropout = identity at eval) + fc2, tiled over the batch.
# ----------------------------------------------------------------------------
def _mlp_kernel(x_ref, w1_ref, b1_ref, w2_ref, b2_ref, o_ref):
    h = jnp.dot(x_ref[...], w1_ref[...], preferred_element_type=jnp.float32) + b1_ref[...]
    h = jnp.maximum(h, 0.0).astype(jnp.bfloat16)
    # TODO(synk): nn.Dropout(0.25) is identity at inference/eval; train-mode RNG dropout not modeled.
    o_ref[...] = jnp.dot(h, w2_ref[...], preferred_element_type=jnp.float32) + b2_ref[...]


def mlp_head(feats, w1, b1, w2, b2, *, tile_n=128):
    # NOTE: fc weights are stored (in, out) and used as x @ W; torch nn.Linear stores (out, in),
    # so real PyTorch checkpoints must be transposed when loaded.
    N, F = feats.shape
    Hd = w1.shape[1]
    Cls = w2.shape[1]
    tn = min(tile_n, N)
    return pl.pallas_call(
        _mlp_kernel,
        out_shape=jax.ShapeDtypeStruct((N, Cls), jnp.float32),
        grid=(pl.cdiv(N, tn),),
        in_specs=[
            pl.BlockSpec((tn, F), lambda i: (i, 0)),
            pl.BlockSpec((F, Hd), lambda i: (0, 0)),      # fc weights resident across the grid
            pl.BlockSpec((1, Hd), lambda i: (0, 0)),
            pl.BlockSpec((Hd, Cls), lambda i: (0, 0)),
            pl.BlockSpec((1, Cls), lambda i: (0, 0)),
        ],
        out_specs=pl.BlockSpec((tn, Cls), lambda i: (i, 0)),
        compiler_params=pltpu.CompilerParams(dimension_semantics=("parallel",)),
    )(feats, w1.astype(jnp.bfloat16), b1, w2.astype(jnp.bfloat16), b2)


# ----------------------------------------------------------------------------
# TinyModel forward + deterministic parameter init.
# ----------------------------------------------------------------------------
def init_params(key, num_classes=10):
    k = jax.random.split(key, 10)

    def conv_init(kw, kb, co, ci):
        std = (2.0 / (ci * 9)) ** 0.5
        w = std * jax.random.normal(kw, (co, ci, 3, 3), jnp.float32)
        b = 0.01 * jax.random.normal(kb, (co,), jnp.float32)
        return w, b

    c1w, c1b = conv_init(k[0], k[1], 16, 3)
    c2w, c2b = conv_init(k[2], k[3], 32, 16)
    c3w, c3b = conv_init(k[4], k[5], 64, 32)
    f1w = (2.0 / 4096) ** 0.5 * jax.random.normal(k[6], (64 * 8 * 8, 128), jnp.float32)
    f1b = 0.01 * jax.random.normal(k[7], (1, 128), jnp.float32)
    f2w = (2.0 / 128) ** 0.5 * jax.random.normal(k[8], (128, num_classes), jnp.float32)
    f2b = 0.01 * jax.random.normal(k[9], (1, num_classes), jnp.float32)
    return dict(conv1_w=c1w, conv1_b=c1b, conv2_w=c2w, conv2_b=c2b,
                conv3_w=c3w, conv3_b=c3b, fc1_w=f1w, fc1_b=f1b,
                fc2_w=f2w, fc2_b=f2b)


def tiny_model_forward(params, x):
    # x: (N, 3, 64, 64) NCHW float32, same as the PyTorch module.
    feats = conv_stack(x, params)                                      # (N, 4096) bf16
    return mlp_head(feats, params["fc1_w"], params["fc1_b"],
                    params["fc2_w"], params["fc2_b"])                  # (N, num_classes) f32


# ----------------------------------------------------------------------------
# Pure-XLA reference with identical bf16-operand / f32-accumulate numerics.
# ----------------------------------------------------------------------------
def reference_forward(params, x):
    bf = jnp.bfloat16

    def conv_relu_pool(y, w, b):
        y = lax.conv_general_dilated(
            y.astype(bf), w.astype(bf), window_strides=(1, 1), padding=((1, 1), (1, 1)),
            dimension_numbers=("NCHW", "OIHW", "NCHW"), preferred_element_type=jnp.float32)
        y = jnp.maximum(y + b.reshape(1, -1, 1, 1), 0.0).astype(bf)
        return lax.reduce_window(y, jnp.array(-jnp.inf, bf), lax.max,
                                 (1, 1, 2, 2), (1, 1, 2, 2), "VALID")

    y = conv_relu_pool(x, params["conv1_w"], params["conv1_b"])
    y = conv_relu_pool(y, params["conv2_w"], params["conv2_b"])
    y = conv_relu_pool(y, params["conv3_w"], params["conv3_b"])
    feats = y.reshape(y.shape[0], -1)
    h = jnp.dot(feats, params["fc1_w"].astype(bf),
                preferred_element_type=jnp.float32) + params["fc1_b"]
    h = jnp.maximum(h, 0.0).astype(bf)
    return jnp.dot(h, params["fc2_w"].astype(bf),
                   preferred_element_type=jnp.float32) + params["fc2_b"]


if __name__ == "__main__":
    _roll_matches_jnp()   # warm the one-time roll-convention probe outside any trace

    key = jax.random.PRNGKey(0)
    k_x, k_p = jax.random.split(key)
    params = init_params(k_p, num_classes=10)
    # fc1 expects 64*8*8 features -> input spatial must be 64x64 (three /2 pools); batch = 2.
    x = jax.random.normal(k_x, (2, 3, 64, 64), jnp.float32)

    fwd = jax.jit(tiny_model_forward)
    logits = fwd(params, x)
    jax.block_until_ready(logits)

    assert logits.shape == (2, 10), logits.shape
    assert logits.dtype == jnp.float32, logits.dtype
    assert bool(jnp.all(jnp.isfinite(logits)))

    ref = reference_forward(params, x)
    err = float(jnp.max(jnp.abs(logits - ref)))
    assert err < 5e-2, f"kernel vs XLA reference mismatch: max abs err = {err}"
    print("KERNEL_OK")
</pallas_src>

<mosaic_0001>
module attributes {stable_mosaic.version = 11 : i64} {
  func.func @k(%arg0: memref<8x128xf32, #tpu.memory_space<vmem>>, %arg1: memref<8x128xf32, #tpu.memory_space<vmem>>) attributes {dimension_semantics = [], scalar_prefetch = 0 : i64, scratch_operands = 0 : i64, tpu.core_type = #tpu.core_type<tc>} {
    %c0 = arith.constant 0 : index
    %c0_0 = arith.constant 0 : index
    %0 = vector.load %arg0[%c0, %c0_0] : memref<8x128xf32, #tpu.memory_space<vmem>>, vector<8x128xf32>
    %c1_i32 = arith.constant 1 : i32
    %1 = tpu.dynamic_rotate %0 by %c1_i32 dim 1 : vector<8x128xf32>, i32 -> vector<8x128xf32>
    %c0_1 = arith.constant 0 : index
    %c0_2 = arith.constant 0 : index
    %2 = vector.load %arg1[%c0_1, %c0_2] : memref<8x128xf32, #tpu.memory_space<vmem>>, vector<8x128xf32>
    tpu.vector_store %arg1[%c0_1, %c0_2], %1 {strides = array<i32>} : memref<8x128xf32, #tpu.memory_space<vmem>>, vector<8x128xf32>,
    return
  }
}

</mosaic_0001>

<llo_original>
// kernel: tpu_custom_call.1
$region0: #{tpu_custom_call.1}
  #allocation0 [shape = 'u32[]', space=smem, size = 0x4, offset = 0x4, fixed_abs, tag = 'smem constant byte address 0x4 - core index']
  #allocation1 [shape = 'u32[144,128]{1,0:T(1,128)}', space=vmem, size = 0x12000, scoped, tag = 'internal scratch']
  %s0 = inlined_call_operand.hbm [shape: f32[8,128], index: 0, kind: input, shape index: {}]
  %s1 = inlined_call_operand.hbm [shape: f32[8,128], index: 1, kind: output, shape index: {}]
  %s2 = sld [smem:[#allocation0]]
  $region18: #{tpu_custom_call.1} parent=0
    _
  %s4 = ssub.s32 1, %s2
  %s5 = scalar_select 0, %s4, %s2
  $region1: #{tpu_custom_call.1} parent=0
    #allocation2 [shape = 'u8[4096]{0}', space=vmem, size = 0x1000, scoped, tag = 'input window, operand 0, single buffered']
    #allocation3 [shape = 's32[1]{0}', space=sflag, size = 0x4, scoped, tag = 'scoped memory for tpu_custom_call.1']
    #allocation4 [shape = 's32[1]{0}', space=sflag, size = 0x4, scoped, tag = 'scoped memory for tpu_custom_call.1']
    #allocation5 [shape = 'u8[4096]{0}', space=vmem, size = 0x1000, scoped, tag = 'output window, operand 0, single buffered']
    %6 = vsyncpa [#allocation3], 0
    %7 = vsyncpa [#allocation4], 0
    // Predicated region
    $region2: #{tpu_custom_call.1} parent=1 // pred_check
      _
    $region3: #{tpu_custom_call.1} parent=1 // pred_check_branch
      %9 = sbr.rel (0) target = $region5
    $region4: #{tpu_custom_call.1} parent=1 // pred_region
      %s11 = ssub.s32 128, 128
      %12 = vsyncadd [#allocation3], %s11
      %s14 = sshll.u32 [#allocation2], 4
      %s15 = int_to_ptr.vmem [resolvable:$true] %s14
      %17 = dma.hbm_to_vmem [thread:$0]  %s0, 128, %s15, [#allocation3]
    $region5: #{tpu_custom_call.1} parent=1 // pred_fallthru
      _
    // Predicated region
    $region6: #{tpu_custom_call.1} parent=1 // pred_check
      _
    $region7: #{tpu_custom_call.1} parent=1 // pred_check_branch
      %19 = sbr.rel (0) target = $region9
    $region8: #{tpu_custom_call.1} parent=1 // pred_region
      %20 = dma.done [#allocation3], 128
    $region9: #{tpu_custom_call.1} parent=1 // pred_fallthru
      _
    %v21 = vld [vmem:[#allocation2] sm:$0xff]
    %22 = vrot.lane.b32.xlu0 %v21, 1
    %v23 = vpop.permute.xlu0 %22
    %24 = vst [vmem:[#allocation5] sm:$0xff] %v23
    // Predicated region
    $region10: #{tpu_custom_call.1} parent=1 // pred_check
      _
    $region11: #{tpu_custom_call.1} parent=1 // pred_check_branch
      %26 = sbr.rel (0) target = $region13
    $region12: #{tpu_custom_call.1} parent=1 // pred_region
      %s28 = ssub.s32 128, 128
      %29 = vsyncadd [#allocation4], %s28
      %s31 = sshll.u32 [#allocation5], 4
      %s32 = int_to_ptr.vmem [resolvable:$true] %s31
      %34 = dma.vmem_to_hbm [thread:$0]  %s32, 128, %s1, [#allocation4]
    $region13: #{tpu_custom_call.1} parent=1 // pred_fallthru
      _
    // Predicated region
    $region14: #{tpu_custom_call.1} parent=1 // pred_check
      _
    $region15: #{tpu_custom_call.1} parent=1 // pred_check_branch
      %36 = sbr.rel (0) target = $region17
    $region16: #{tpu_custom_call.1} parent=1 // pred_region
      %37 = dma.done [#allocation4], 128
    $region17: #{tpu_custom_call.1} parent=1 // pred_fallthru
      _
    %38 = vsyncpa [#allocation3], 1
    %39 = vsyncpa [#allocation4], 1

</llo_original>
